<compile_context>
chip_gen: v7x
topology: tpu7x:2x2x1
jax: 0.10.0
libtpu: 0.0.40
codegen_flags: <defaults>
</compile_context>

<pallas_src>
import functools

import jax
import jax.numpy as jnp
from jax.experimental import pallas as pl
from jax.experimental.pallas import tpu as pltpu


def _value_kernel(x_ref, w1_ref, b1_ref, w2_ref, b2_ref, w3_ref, b3_ref, o_ref):
    # fc1 + ReLU: bf16 MXU matmul, f32 accumulate.  (K = input_dims is tiny; this
    # under-fills the MXU but is a negligible fraction of total work vs fc2.)
    x = x_ref[...].astype(jnp.bfloat16)
    h1 = jnp.dot(x, w1_ref[...], preferred_element_type=jnp.float32)
    h1 = jnp.maximum(h1 + b1_ref[...], 0.0)

    # fc2 + ReLU: the dominant 256x256 matmul, bf16 operands / f32 accumulate.
    h2 = jnp.dot(h1.astype(jnp.bfloat16), w2_ref[...],
                 preferred_element_type=jnp.float32)
    h2 = jnp.maximum(h2 + b2_ref[...], 0.0)

    # fc3 (output width 1): keep it off the MXU.  VPU multiply + lane reduction,
    # f32 throughout; b3 is a true scalar read from SMEM.
    out = jnp.sum(h2 * w3_ref[...], axis=-1, keepdims=True) + b3_ref[0]
    o_ref[...] = out.astype(o_ref.dtype)


def _round_up(x, m):
    return (x + m - 1) // m * m


@functools.partial(jax.jit, static_argnames=("block_b",))
def value_network_forward(state, w1, b1, w2, b2, w3, b3, *, block_b=256):
    """Pallas forward of ValueNetwork (Linear->ReLU->Linear->ReLU->Linear).

    Weights are expected in (fan_in, fan_out) layout, biases as (1, fan_out).
    """
    batch, input_dims = state.shape
    fc1_dims = w1.shape[1]
    fc2_dims = w2.shape[1]

    # bf16 weights for the MXU (cast once, outside the kernel); biases and the
    # 1-wide head stay f32 for accumulation precision.
    w1_bf = w1.astype(jnp.bfloat16)
    w2_bf = w2.astype(jnp.bfloat16)
    b1_row = b1.reshape(1, fc1_dims).astype(jnp.float32)
    b2_row = b2.reshape(1, fc2_dims).astype(jnp.float32)
    w3_row = w3.reshape(1, fc2_dims).astype(jnp.float32)
    b3_s = b3.reshape(1).astype(jnp.float32)

    # Batch tiling: shrink the tile for tiny batches, pad to a tile multiple.
    block_b = min(block_b, _round_up(batch, 8))
    padded = _round_up(batch, block_b)
    x = state.astype(jnp.float32)
    if padded != batch:
        x = jnp.pad(x, ((0, padded - batch), (0, 0)))
    grid = (padded // block_b,)

    resident = lambda shape: pl.BlockSpec(shape, lambda i: (0, 0))

    out = pl.pallas_call(
        _value_kernel,
        out_shape=jax.ShapeDtypeStruct((padded, 1), jnp.float32),
        grid=grid,
        in_specs=[
            pl.BlockSpec((block_b, input_dims), lambda i: (i, 0)),  # state tile
            resident((input_dims, fc1_dims)),                       # w1 (bf16)
            resident((1, fc1_dims)),                                # b1
            resident((fc1_dims, fc2_dims)),                         # w2 (bf16)
            resident((1, fc2_dims)),                                # b2
            resident((1, fc2_dims)),                                # w3 as a row
            pl.BlockSpec(memory_space=pltpu.MemorySpace.SMEM),      # b3 scalar
        ],
        out_specs=pl.BlockSpec((block_b, 1), lambda i: (i, 0)),
        compiler_params=pltpu.CompilerParams(
            # Batch tiles are independent -> shard across v7x's two TensorCores
            # (harmless / no-op on single-TC v5e / v6e).
            dimension_semantics=("parallel",)),
        # NOTE: at fc_dims=256 the resident weights total ~160 KiB, far below any
        # VMEM limit.  If fc_dims is ever scaled up (>= 4096), re-budget: bf16
        # weights, K-tile w2 with a reduction grid axis, pl.Buffered(1) on the
        # resident specs, and an explicit vmem_limit_bytes.
    )(x, w1_bf, b1_row, w2_bf, b2_row, w3_row, b3_s)

    return out[:batch]


def init_linear_params(key, fan_in, fan_out):
    """Matches nn.Linear default init: U[-1/sqrt(fan_in), +1/sqrt(fan_in)].

    Weights are stored already transposed to (fan_in, fan_out) for x @ W layout.
    """
    kw, kb = jax.random.split(key)
    bound = 1.0 / jnp.sqrt(jnp.float32(fan_in))
    w = jax.random.uniform(kw, (fan_in, fan_out), jnp.float32, -bound, bound)
    b = jax.random.uniform(kb, (1, fan_out), jnp.float32, -bound, bound)
    return w, b


if __name__ == "__main__":
    input_dims = 8       # small state vector, as in the BS_EV environment
    fc1_dims = 256
    fc2_dims = 256
    batch = 200          # non-multiple of the tile: exercises padding + a 2-step grid

    key = jax.random.PRNGKey(0)
    k_x, k1, k2, k3 = jax.random.split(key, 4)

    state = jax.random.normal(k_x, (batch, input_dims), jnp.float32)
    w1, b1 = init_linear_params(k1, input_dims, fc1_dims)
    w2, b2 = init_linear_params(k2, fc1_dims, fc2_dims)
    w3, b3 = init_linear_params(k3, fc2_dims, 1)

    value = value_network_forward(state, w1, b1, w2, b2, w3, b3, block_b=128)
    jax.block_until_ready(value)

    # Pure-JAX reference with the same numerics (bf16 MXU operands, f32 accumulate).
    w1_bf = w1.astype(jnp.bfloat16)
    w2_bf = w2.astype(jnp.bfloat16)
    h = jnp.maximum(
        jnp.dot(state.astype(jnp.bfloat16), w1_bf,
                preferred_element_type=jnp.float32) + b1, 0.0)
    h = jnp.maximum(
        jnp.dot(h.astype(jnp.bfloat16), w2_bf,
                preferred_element_type=jnp.float32) + b2, 0.0)
    ref = jnp.sum(h * w3.reshape(1, -1), axis=-1, keepdims=True) + b3

    assert value.shape == (batch, 1)
    assert jnp.allclose(value, ref, atol=1e-3, rtol=1e-3), \
        float(jnp.max(jnp.abs(value - ref)))
    print("KERNEL_OK")
</pallas_src>

<mosaic_0001>
module attributes {stable_mosaic.version = 11 : i64} {
  func.func @_value_kernel(%arg0: i32, %arg1: memref<128x8xf32, #tpu.memory_space<vmem>>, %arg2: memref<8x256xbf16, #tpu.memory_space<vmem>>, %arg3: memref<1x256xf32, #tpu.memory_space<vmem>>, %arg4: memref<256x256xbf16, #tpu.memory_space<vmem>>, %arg5: memref<1x256xf32, #tpu.memory_space<vmem>>, %arg6: memref<1x256xf32, #tpu.memory_space<vmem>>, %arg7: memref<1xf32, #tpu.memory_space<smem>>, %arg8: memref<128x1xf32, #tpu.memory_space<vmem>>) attributes {dimension_semantics = [#tpu.dimension_semantics<parallel>], iteration_bounds = array<i64: 2>, scalar_prefetch = 0 : i64, scratch_operands = 0 : i64, tpu.core_type = #tpu.core_type<tc>, window_params = [{transform_indices = @transform_0, window_bounds = array<i64: 128, 8>}, {pipeline_mode = #tpu.pipeline_mode<synchronous>, transform_indices = @transform_1, window_bounds = array<i64: 8, 256>}, {pipeline_mode = #tpu.pipeline_mode<synchronous>, transform_indices = @transform_2, window_bounds = array<i64: 1, 256>}, {pipeline_mode = #tpu.pipeline_mode<synchronous>, transform_indices = @transform_3, window_bounds = array<i64: 256, 256>}, {pipeline_mode = #tpu.pipeline_mode<synchronous>, transform_indices = @transform_4, window_bounds = array<i64: 1, 256>}, {pipeline_mode = #tpu.pipeline_mode<synchronous>, transform_indices = @transform_5, window_bounds = array<i64: 1, 256>}, {transform_indices = @transform_6, window_bounds = array<i64: 1>}, {transform_indices = @transform_7, window_bounds = array<i64: 128, 1>}]} {
    %c0 = arith.constant 0 : index
    %c0_0 = arith.constant 0 : index
    %0 = vector.load %arg1[%c0, %c0_0] : memref<128x8xf32, #tpu.memory_space<vmem>>, vector<128x8xf32>
    %1 = arith.truncf %0 : vector<128x8xf32> to vector<128x8xbf16>
    %c0_1 = arith.constant 0 : index
    %c0_2 = arith.constant 0 : index
    %2 = vector.load %arg2[%c0_1, %c0_2] : memref<8x256xbf16, #tpu.memory_space<vmem>>, vector<8x256xbf16>
    %cst = arith.constant dense<0.000000e+00> : vector<128x256xf32>
    %3 = tpu.matmul %1, %2, %cst {dimension_numbers = #tpu.dot_dimension_numbers<[1], [0], [0], [1], [0, 0, 1, 1], [], []>} : vector<128x8xbf16>, vector<8x256xbf16>, vector<128x256xf32> -> vector<128x256xf32>
    %c0_3 = arith.constant 0 : index
    %c0_4 = arith.constant 0 : index
    %4 = vector.load %arg3[%c0_3, %c0_4] : memref<1x256xf32, #tpu.memory_space<vmem>>, vector<1x256xf32>
    %5 = vector.broadcast %4 : vector<1x256xf32> to vector<128x256xf32>
    %6 = arith.addf %3, %5 : vector<128x256xf32>
    %cst_5 = arith.constant 0.000000e+00 : f32
    %7 = vector.broadcast %cst_5 : f32 to vector<128x256xf32>
    %8 = arith.maximumf %6, %7 : vector<128x256xf32>
    %9 = arith.truncf %8 : vector<128x256xf32> to vector<128x256xbf16>
    %c0_6 = arith.constant 0 : index
    %c0_7 = arith.constant 0 : index
    %10 = vector.load %arg4[%c0_6, %c0_7] : memref<256x256xbf16, #tpu.memory_space<vmem>>, vector<256x256xbf16>
    %cst_8 = arith.constant dense<0.000000e+00> : vector<128x256xf32>
    %11 = tpu.matmul %9, %10, %cst_8 {dimension_numbers = #tpu.dot_dimension_numbers<[1], [0], [0], [1], [0, 0, 1, 1], [], []>} : vector<128x256xbf16>, vector<256x256xbf16>, vector<128x256xf32> -> vector<128x256xf32>
    %c0_9 = arith.constant 0 : index
    %c0_10 = arith.constant 0 : index
    %12 = vector.load %arg5[%c0_9, %c0_10] : memref<1x256xf32, #tpu.memory_space<vmem>>, vector<1x256xf32>
    %13 = vector.broadcast %12 : vector<1x256xf32> to vector<128x256xf32>
    %14 = arith.addf %11, %13 : vector<128x256xf32>
    %cst_11 = arith.constant 0.000000e+00 : f32
    %15 = vector.broadcast %cst_11 : f32 to vector<128x256xf32>
    %16 = arith.maximumf %14, %15 : vector<128x256xf32>
    %c0_12 = arith.constant 0 : index
    %c0_13 = arith.constant 0 : index
    %17 = vector.load %arg6[%c0_12, %c0_13] : memref<1x256xf32, #tpu.memory_space<vmem>>, vector<1x256xf32>
    %18 = vector.broadcast %17 : vector<1x256xf32> to vector<128x256xf32>
    %19 = arith.mulf %16, %18 : vector<128x256xf32>
    %cst_14 = arith.constant dense<0.000000e+00> : vector<128xf32>
    %20 = vector.multi_reduction <add>, %19, %cst_14 [1] : vector<128x256xf32> to vector<128xf32>
    %21 = vector.shape_cast %20 : vector<128xf32> to vector<128x1xf32>
    %c0_15 = arith.constant 0 : index
    %22 = memref.load %arg7[%c0_15] : memref<1xf32, #tpu.memory_space<smem>>
    %23 = vector.broadcast %22 : f32 to vector<128x1xf32>
    %24 = arith.addf %21, %23 : vector<128x1xf32>
    %c0_16 = arith.constant 0 : index
    %c0_17 = arith.constant 0 : index
    %25 = vector.load %arg8[%c0_16, %c0_17] : memref<128x1xf32, #tpu.memory_space<vmem>>, vector<128x1xf32>
    tpu.vector_store %arg8[%c0_16, %c0_17], %24 {strides = array<i32>} : memref<128x1xf32, #tpu.memory_space<vmem>>, vector<128x1xf32>,
    return
  }
  func.func @transform_0(%arg0: i32) -> (i32, i32) {
    %c0_i32 = arith.constant 0 : i32
    %c0_i32_0 = arith.constant 0 : i32
    return %arg0, %c0_i32 : i32, i32
  }
  func.func @transform_1(%arg0: i32) -> (i32, i32) {
    %c0_i32 = arith.constant 0 : i32
    %c0_i32_0 = arith.constant 0 : i32
    %c0_i32_1 = arith.constant 0 : i32
    return %c0_i32, %c0_i32_0 : i32, i32
  }
  func.func @transform_2(%arg0: i32) -> (i32, i32) {
    %c0_i32 = arith.constant 0 : i32
    %c0_i32_0 = arith.constant 0 : i32
    %c0_i32_1 = arith.constant 0 : i32
    return %c0_i32, %c0_i32_0 : i32, i32
  }
  func.func @transform_3(%arg0: i32) -> (i32, i32) {
    %c0_i32 = arith.constant 0 : i32
    %c0_i32_0 = arith.constant 0 : i32
    %c0_i32_1 = arith.constant 0 : i32
    return %c0_i32, %c0_i32_0 : i32, i32
  }
  func.func @transform_4(%arg0: i32) -> (i32, i32) {
    %c0_i32 = arith.constant 0 : i32
    %c0_i32_0 = arith.constant 0 : i32
    %c0_i32_1 = arith.constant 0 : i32
    return %c0_i32, %c0_i32_0 : i32, i32
  }
  func.func @transform_5(%arg0: i32) -> (i32, i32) {
    %c0_i32 = arith.constant 0 : i32
    %c0_i32_0 = arith.constant 0 : i32
    %c0_i32_1 = arith.constant 0 : i32
    return %c0_i32, %c0_i32_0 : i32, i32
  }
  func.func @transform_6(%arg0: i32) -> i32 {
    %c0_i32 = arith.constant 0 : i32
    %c0_i32_0 = arith.constant 0 : i32
    return %c0_i32 : i32
  }
  func.func @transform_7(%arg0: i32) -> (i32, i32) {
    %c0_i32 = arith.constant 0 : i32
    %c0_i32_0 = arith.constant 0 : i32
    return %arg0, %c0_i32 : i32, i32
  }
}

</mosaic_0001>

<llo_original>
// kernel: value_network_forward.1
$region0: #{value_network_forward.1}
  #allocation0 [shape = 'u32[]', space=smem, size = 0x4, offset = 0x4, fixed_abs, tag = 'smem constant byte address 0x4 - core index']
  #allocation1 [shape = 'u32[144,128]{1,0:T(1,128)}', space=vmem, size = 0x12000, scoped, tag = 'internal scratch']
  #allocation2 [shape = 'f32[1]{0:T(128)S(6)}', space=smem, size = 0x200, scoped, tag = 'scoped memory for value_network_forward.1']
  %s0 = inlined_call_operand.vmem [shape: f32[256,8], index: 0, kind: input, shape index: {}]
  %s1 = inlined_call_operand.vmem [shape: bf16[8,256], index: 1, kind: input, shape index: {}]
  %s2 = inlined_call_operand.vmem [shape: f32[1,256], index: 2, kind: input, shape index: {}]
  %s3 = inlined_call_operand.vmem [shape: bf16[256,256], index: 3, kind: input, shape index: {}]
  %s4 = inlined_call_operand.vmem [shape: f32[1,256], index: 4, kind: input, shape index: {}]
  %s5 = inlined_call_operand.vmem [shape: f32[1,256], index: 5, kind: input, shape index: {}]
  %s6 = inlined_call_operand.<no memory space> [shape: f32[1], index: 6, kind: input, shape index: {}]
  %s7 = inlined_call_operand.vmem [shape: f32[256,1], index: 7, kind: output, shape index: {}]
  %s8 = sld [smem:[#allocation0]]
  $region61: #{value_network_forward.1} parent=0
    _
  %s10 = ssub.s32 1, %s8
  %s11 = scalar_select 0, %s10, %s8
  %12 = sst [smem:[#allocation2]] %s6
  loop: start=0, step=1, limit=4
  $region2: #{value_network_forward.1} parent=0 // loop_pre_header
    _
  $region3: #{value_network_forward.1} parent=0 // loop_header
    %s14 = sphi 0, %s18
    %p15 = scmp.ge.s32.totalorder %s14, 4
    %s24 = sphi 0, %s26
    %s27 = sphi 0, %s24
    %s28 = sphi 0, %s27
    %s44 = sphi 0, %s28
    %s48 = sphi 0, %s48
    %s50 = sphi 0, %s48
    %s51 = sphi 0, %s50
    %s65 = sphi 0, %s51
    %s69 = sphi 0, %s69
    %s71 = sphi 0, %s69
    %s72 = sphi 0, %s71
    %s86 = sphi 0, %s72
    %s90 = sphi 0, %s90
    %s92 = sphi 0, %s90
    %s93 = sphi 0, %s92
    %s107 = sphi 0, %s93
    %s111 = sphi 0, %s111
    %s113 = sphi 0, %s111
    %s114 = sphi 0, %s113
    %s128 = sphi 0, %s114
    %s132 = sphi 0, %s132
    %s134 = sphi 0, %s132
    %s135 = sphi 0, %s134
    %s149 = sphi 0, %s135
    %s153 = sphi 0, %s153
    %s155 = sphi 0, %s153
    %s156 = sphi 0, %s155
    %s170 = sphi 0, %s156
    %s176 = sphi 0, %s178
    %s179 = sphi 0, %s176
    %s180 = sphi 0, %s179
    %s196 = sphi 0, %s180
  $region4: #{value_network_forward.1} parent=0 // loop_header_branch
    %17 = sbr.rel (%p15) target = $region8
  $region5: #{value_network_forward.1} parent=0 // loop_body
    %s19 = ssub.s32 %s14, 1
    %s20 = ssub.s32 %s14, 2
    %s21 = sadd.s32 %s14, 1
    %s22 = ssub.s32 %s14, %s21
    %p23 = scmp.eq.s32.totalorder %s22, 0
    %s25 = sadd.s32 %s24, 1
    %s26 = scalar_select %p23, %s24, %s25
    %p29 = pneg %p23
    %p30 = scmp.eq.s32.totalorder %s14, 1
    %p31 = por %p29, %p30
    %p32 = scmp.ne.s32.totalorder %s24, %s27
    %p33 = scmp.eq.s32.totalorder %s14, 0
    %p34 = por %p32, %p33
    %p35 = scmp.ne.s32.totalorder %s24, %s27
    %p36 = scmp.eq.s32.totalorder %s19, 1
    %p37 = por %p35, %p36
    %p38 = scmp.ne.s32.totalorder %s27, %s28
    %p39 = scmp.eq.s32.totalorder %s19, 0
    %p40 = por %p38, %p39
    %p41 = scmp.ne.s32.totalorder %s27, %s28
    %p42 = scmp.eq.s32.totalorder %s20, 1
    %p43 = por %p41, %p42
    %p45 = scmp.ne.s32.totalorder %s28, %s44
    %p46 = scmp.eq.s32.totalorder %s20, 0
    %p47 = por %p45, %p46
    %s49 = sadd.s32 %s48, 1
    %p52 = scmp.eq.s32.totalorder %s14, 1
    %p53 = scmp.ne.s32.totalorder %s48, %s50
    %p54 = scmp.eq.s32.totalorder %s14, 0
    %p55 = por %p53, %p54
    %p56 = scmp.ne.s32.totalorder %s48, %s50
    %p57 = scmp.eq.s32.totalorder %s19, 1
    %p58 = por %p56, %p57
    %p59 = scmp.ne.s32.totalorder %s50, %s51
    %p60 = scmp.eq.s32.totalorder %s19, 0
    %p61 = por %p59, %p60
    %p62 = scmp.ne.s32.totalorder %s50, %s51
    %p63 = scmp.eq.s32.totalorder %s20, 1
    %p64 = por %p62, %p63
    %p66 = scmp.ne.s32.totalorder %s51, %s65
    %p67 = scmp.eq.s32.totalorder %s20, 0
    %p68 = por %p66, %p67
    %s70 = sadd.s32 %s69, 1
    %p73 = scmp.eq.s32.totalorder %s14, 1
    %p74 = scmp.ne.s32.totalorder %s69, %s71
    %p75 = scmp.eq.s32.totalorder %s14, 0
    %p76 = por %p74, %p75
    %p77 = scmp.ne.s32.totalorder %s69, %s71
    %p78 = scmp.eq.s32.totalorder %s19, 1
    %p79 = por %p77, %p78
    %p80 = scmp.ne.s32.totalorder %s71, %s72
    %p81 = scmp.eq.s32.totalorder %s19, 0
    %p82 = por %p80, %p81
    %p83 = scmp.ne.s32.totalorder %s71, %s72
    %p84 = scmp.eq.s32.totalorder %s20, 1
    %p85 = por %p83, %p84
    %p87 = scmp.ne.s32.totalorder %s72, %s86
    %p88 = scmp.eq.s32.totalorder %s20, 0
    %p89 = por %p87, %p88
    %s91 = sadd.s32 %s90, 1
    %p94 = scmp.eq.s32.totalorder %s14, 1
    %p95 = scmp.ne.s32.totalorder %s90, %s92
    %p96 = scmp.eq.s32.totalorder %s14, 0
    %p97 = por %p95, %p96
    %p98 = scmp.ne.s32.totalorder %s90, %s92
    %p99 = scmp.eq.s32.totalorder %s19, 1
    %p100 = por %p98, %p99
    %p101 = scmp.ne.s32.totalorder %s92, %s93
    %p102 = scmp.eq.s32.totalorder %s19, 0
    %p103 = por %p101, %p102
    %p104 = scmp.ne.s32.totalorder %s92, %s93
    %p105 = scmp.eq.s32.totalorder %s20, 1
    %p106 = por %p104, %p105
    %p108 = scmp.ne.s32.totalorder %s93, %s107
    %p109 = scmp.eq.s32.totalorder %s20, 0
    %p110 = por %p108, %p109
    %s112 = sadd.s32 %s111, 1
    %p115 = scmp.eq.s32.totalorder %s14, 1
    %p116 = scmp.ne.s32.totalorder %s111, %s113
    %p117 = scmp.eq.s32.totalorder %s14, 0
    %p118 = por %p116, %p117
    %p119 = scmp.ne.s32.totalorder %s111, %s113
    %p120 = scmp.eq.s32.totalorder %s19, 1
    %p121 = por %p119, %p120
    %p122 = scmp.ne.s32.totalorder %s113, %s114
    %p123 = scmp.eq.s32.totalorder %s19, 0
    %p124 = por %p122, %p123
    %p125 = scmp.ne.s32.totalorder %s113, %s114
    %p126 = scmp.eq.s32.totalorder %s20, 1
    %p127 = por %p125, %p126
    %p129 = scmp.ne.s32.totalorder %s114, %s128
    %p130 = scmp.eq.s32.totalorder %s20, 0
    %p131 = por %p129, %p130
    %s133 = sadd.s32 %s132, 1
    %p136 = scmp.eq.s32.totalorder %s14, 1
    %p137 = scmp.ne.s32.totalorder %s132, %s134
    %p138 = scmp.eq.s32.totalorder %s14, 0
    %p139 = por %p137, %p138
    %p140 = scmp.ne.s32.totalorder %s132, %s134
    %p141 = scmp.eq.s32.totalorder %s19, 1
    %p142 = por %p140, %p141
    %p143 = scmp.ne.s32.totalorder %s134, %s135
    %p144 = scmp.eq.s32.totalorder %s19, 0
    %p145 = por %p143, %p144
    %p146 = scmp.ne.s32.totalorder %s134, %s135
    %p147 = scmp.eq.s32.totalorder %s20, 1
    %p148 = por %p146, %p147
    %p150 = scmp.ne.s32.totalorder %s135, %s149
    %p151 = scmp.eq.s32.totalorder %s20, 0
    %p152 = por %p150, %p151
    %s154 = sadd.s32 %s153, 1
    %p157 = scmp.eq.s32.totalorder %s14, 1
    %p158 = scmp.ne.s32.totalorder %s153, %s155
    %p159 = scmp.eq.s32.totalorder %s14, 0
    %p160 = por %p158, %p159
    %p161 = scmp.ne.s32.totalorder %s153, %s155
    %p162 = scmp.eq.s32.totalorder %s19, 1
    %p163 = por %p161, %p162
    %p164 = scmp.ne.s32.totalorder %s155, %s156
    %p165 = scmp.eq.s32.totalorder %s19, 0
    %p166 = por %p164, %p165
    %p167 = scmp.ne.s32.totalorder %s155, %s156
    %p168 = scmp.eq.s32.totalorder %s20, 1
    %p169 = por %p167, %p168
    %p171 = scmp.ne.s32.totalorder %s156, %s170
    %p172 = scmp.eq.s32.totalorder %s20, 0
    %p173 = por %p171, %p172
    %s174 = ssub.s32 %s14, %s21
    %p175 = scmp.eq.s32.totalorder %s174, 0
    %s177 = sadd.s32 %s176, 1
    %s178 = scalar_select %p175, %s176, %s177
    %p181 = pneg %p175
    %p182 = scmp.eq.s32.totalorder %s14, 1
    %p183 = por %p181, %p182
    %p184 = scmp.ne.s32.totalorder %s176, %s179
    %p185 = scmp.eq.s32.totalorder %s14, 0
    %p186 = por %p184, %p185
    %p187 = scmp.ne.s32.totalorder %s176, %s179
    %p188 = scmp.eq.s32.totalorder %s19, 1
    %p189 = por %p187, %p188
    %p190 = scmp.ne.s32.totalorder %s179, %s180
    %p191 = scmp.eq.s32.totalorder %s19, 0
    %p192 = por %p190, %p191
    %p193 = scmp.ne.s32.totalorder %s179, %s180
    %p194 = scmp.eq.s32.totalorder %s20, 1
    %p195 = por %p193, %p194
    %p197 = scmp.ne.s32.totalorder %s180, %s196
    %p198 = scmp.eq.s32.totalorder %s20, 0
    %p199 = por %p197, %p198
    %p200 = scmp.le.s32.totalorder 1, %s14
    %p201 = scmp.lt.s32.totalorder %s14, 3
    %p202 = pnand %p200, %p201
    %p203 = pneg %p202
    // Predicated region
    $region9: #{value_network_forward.1} parent=5 // pred_check
      _
    $region10: #{value_network_forward.1} parent=5 // pred_check_branch
      %205 = sbr.rel (%p202) target = $region12
    $region11: #{value_network_forward.1} parent=5 // pred_region
      %s206 = ssub.s32 %s14, 1
      // Predicated region
      $region13: #{value_network_forward.1} parent=11 // pred_check
        %p207 = pneg %p61
      $region14: #{value_network_forward.1} parent=11 // pred_check_branch
        %209 = sbr.rel (%p207) target = $region16
      $region15: #{value_network_forward.1} parent=11 // pred_region
        _
      $region16: #{value_network_forward.1} parent=11 // pred_fallthru
        _
      // Predicated region
      $region17: #{value_network_forward.1} parent=11 // pred_check
        %p210 = pneg %p82
      $region18: #{value_network_forward.1} parent=11 // pred_check_branch
        %212 = sbr.rel (%p210) target = $region20
      $region19: #{value_network_forward.1} parent=11 // pred_region
        _
      $region20: #{value_network_forward.1} parent=11 // pred_fallthru
        _
      // Predicated region
      $region21: #{value_network_forward.1} parent=11 // pred_check
        %p213 = pneg %p103
      $region22: #{value_network_forward.1} parent=11 // pred_check_branch
        %215 = sbr.rel (%p213) target = $region24
      $region23: #{value_network_forward.1} parent=11 // pred_region
        _
      $region24: #{value_network_forward.1} parent=11 // pred_fallthru
        _
      // Predicated region
      $region25: #{value_network_forward.1} parent=11 // pred_check
        %p216 = pneg %p124
      $region26: #{value_network_forward.1} parent=11 // pred_check_branch
        %218 = sbr.rel (%p216) target = $region28
      $region27: #{value_network_forward.1} parent=11 // pred_region
        _
      $region28: #{value_network_forward.1} parent=11 // pred_fallthru
        _
      // Predicated region
      $region29: #{value_network_forward.1} parent=11 // pred_check
        %p219 = pneg %p145
      $region30: #{value_network_forward.1} parent=11 // pred_check_branch
        %221 = sbr.rel (%p219) target = $region32
      $region31: #{value_network_forward.1} parent=11 // pred_region
        _
      $region32: #{value_network_forward.1} parent=11 // pred_fallthru
        _
      // Predicated region
      $region33: #{value_network_forward.1} parent=11 // pred_check
        %p222 = pneg %p166
      $region34: #{value_network_forward.1} parent=11 // pred_check_branch
        %224 = sbr.rel (%p222) target = $region36
      $region35: #{value_network_forward.1} parent=11 // pred_region
        _
      $region36: #{value_network_forward.1} parent=11 // pred_fallthru
        _
    $region12: #{value_network_forward.1} parent=5 // pred_fallthru
      _
    %p225 = scmp.lt.s32.totalorder %s14, 2
    // Predicated region
    $region37: #{value_network_forward.1} parent=5 // pred_check
      %p226 = pneg %p225
    $region38: #{value_network_forward.1} parent=5 // pred_check_branch
      %228 = sbr.rel (%p226) target = $region40
    $region39: #{value_network_forward.1} parent=5 // pred_region
      // Predicated region
      $region41: #{value_network_forward.1} parent=39 // pred_check
        %p229 = pneg %p34
      $region42: #{value_network_forward.1} parent=39 // pred_check_branch
        %231 = sbr.rel (%p229) target = $region44
      $region43: #{value_network_forward.1} parent=39 // pred_region
        %s232 = smul.u32 16, %s14
        %p233 = scmp.lt.s32.totalorder %s232, 31
        %s234 = scalar_select %p233, %s232, 31
        %s235 = smul.addr %s234, 8
        %s236 = scalar_lea.vmem %s0, %s235
        %s237 = smul.u32 16, %s14
      $region44: #{value_network_forward.1} parent=39 // pred_fallthru
        _
    $region40: #{value_network_forward.1} parent=5 // pred_fallthru
      _
    %p238 = scmp.le.s32.totalorder 1, %s14
    %p239 = scmp.lt.s32.totalorder %s14, 3
    %p240 = pnand %p238, %p239
    %p241 = pneg %p240
    // Predicated region
    $region45: #{value_network_forward.1} parent=5 // pred_check
      _
    $region46: #{value_network_forward.1} parent=5 // pred_check_branch
      %243 = sbr.rel (%p240) target = $region48
    $region47: #{value_network_forward.1} parent=5 // pred_region
      %s244 = ssub.s32 %s14, 1
      %s245 = smul.u32 16, %s19
      %p246 = scmp.lt.s32.totalorder %s245, 31
      %s247 = scalar_select %p246, %s245, 31
      %s248 = smul.addr %s247, 8
      %s249 = scalar_lea.vmem %s0, %s248
      %p250 = pneg %p40
      %p251 = pneg %p37
      %p252 = pneg %p61
      %p253 = pneg %p58
      %p254 = pneg %p82
      %p255 = pneg %p79
      %p256 = pneg %p103
      %p257 = pneg %p100
      %p258 = pneg %p124
      %p259 = pneg %p121
      %p260 = pneg %p145
      %p261 = pneg %p142
      %p262 = pneg %p166
      %p263 = pneg %p163
      %p264 = pneg %p192
      %p265 = pneg %p189
      %s266 = smul.u32 16, %s19
      %p267 = scmp.lt.s32.totalorder %s266, 31
      %s268 = scalar_select %p267, %s266, 31
      %s269 = smul.addr %s268, 8
      %s270 = scalar_lea.vmem %s7, %s269
      %s271 = smul.u32 16, %s19
      %p272 = scmp.lt.s32.totalorder %s271, 31
      %s273 = scalar_select %p272, %s271, 31
      %s274 = smul.addr %s273, 8
      %s275 = scalar_lea.vmem %s0, %s274
      %s276 = smul.u32 16, %s19
      %s277 = smul.u32 16, %s19
      %p278 = scmp.lt.s32.totalorder %s277, 31
      %s279 = scalar_select %p278, %s277, 31
      %s280 = smul.addr %s279, 8
      %s281 = scalar_lea.vmem %s7, %s280
      %s282 = smul.u32 16, %s19
      %v284 = vld [vmem:[%s275] sm:$0xff]
      %v285 = vld [vmem:[%s275 + $0x8] sm:$0xff]
      %v286 = vld [vmem:[%s275 + $0x10] sm:$0xff]
      %v287 = vld [vmem:[%s275 + $0x18] sm:$0xff]
      %v288 = vld [vmem:[%s275 + $0x20] sm:$0xff]
      %v289 = vld [vmem:[%s275 + $0x28] sm:$0xff]
      %v290 = vld [vmem:[%s275 + $0x30] sm:$0xff]
      %v291 = vld [vmem:[%s275 + $0x38] sm:$0xff]
      %v292 = vld [vmem:[%s275 + $0x40] sm:$0xff]
      %v293 = vld [vmem:[%s275 + $0x48] sm:$0xff]
      %v294 = vld [vmem:[%s275 + $0x50] sm:$0xff]
      %v295 = vld [vmem:[%s275 + $0x58] sm:$0xff]
      %v296 = vld [vmem:[%s275 + $0x60] sm:$0xff]
      %v297 = vld [vmem:[%s275 + $0x68] sm:$0xff]
      %v298 = vld [vmem:[%s275 + $0x70] sm:$0xff]
      %v299 = vld [vmem:[%s275 + $0x78] sm:$0xff]
      %v300 = vpack.c.bf16 %v285, %v284
      %v301 = vpack.c.bf16 %v287, %v286
      %v302 = vpack.c.bf16 %v289, %v288
      %v303 = vpack.c.bf16 %v291, %v290
      %v304 = vpack.c.bf16 %v293, %v292
      %v305 = vpack.c.bf16 %v295, %v294
      %v306 = vpack.c.bf16 %v297, %v296
      %v307 = vpack.c.bf16 %v299, %v298
      %v308 = vld [vmem:[%s1] sm:$0xff]
      %v309 = vld [vmem:[%s2] sm:$0x3]
      %v311 = vlaneseq
      %v312 = vshrl.u32 %v311, 7
      %v313 = vsub.s32 0, %v312
      %v314 = vrot.slane %v309, %v313
      %v315 = vlaneseq
      %v316 = vshrl.u32 %v315, 7
      %v317 = vsub.s32 1, %v316
      %v318 = vrot.slane %v309, %v317
      %v322 = vunpack.c.l.b16 %v308
      %v323 = vunpack.c.h.b16 %v308
      %v324 = vpack.c.b16 %v322, %v322
      %v325 = vpack.c.b16 %v323, %v323
      %vm326 = vcmask 64512
      %v328 = vsel %vm326, %v300, 0
      %v331 = vsel %vm326, %v301, 0
      %v334 = vsel %vm326, %v302, 0
      %v337 = vsel %vm326, %v303, 0
      %v340 = vsel %vm326, %v304, 0
      %v343 = vsel %vm326, %v305, 0
      %v346 = vsel %vm326, %v306, 0
      %v349 = vsel %vm326, %v307, 0
      %vm351 = vcmask 1043456
      %v353 = vsel %vm351, %v324, 0
      %v356 = vsel %vm351, %v325, 0
      %358 = vmatprep.subr.bf16.mxu0 %v356
      %359 = vmatpush1.bf16.msra.mxu0 %v353
      %360 = vmatprep.subr.bf16.mxu0 0
      %361 = vmatpush1.bf16.msra.mxu0 0
      %362 = vmatprep.subr.bf16.mxu0 0
      %363 = vmatpush1.bf16.msra.mxu0 0
      %364 = vmatprep.subr.bf16.mxu0 0
      %365 = vmatpush1.bf16.msra.mxu0 0
      %366 = vmatprep.subr.bf16.mxu0 0
      %367 = vmatpush1.bf16.msra.mxu0 0
      %368 = vmatprep.subr.bf16.mxu0 0
      %369 = vmatpush1.bf16.msra.mxu0 0
      %370 = vmatprep.subr.bf16.mxu0 0
      %371 = vmatpush1.bf16.msra.mxu0 0
      %372 = vmatprep.subr.bf16.mxu0 0
      %373 = vmatpush1.bf16.msra.mxu0 0
      %374 = vmatprep.subr.bf16.mxu0 0
      %375 = vmatpush1.bf16.msra.mxu0 0
      %376 = vmatprep.subr.bf16.mxu0 0
      %377 = vmatpush1.bf16.msra.mxu0 0
      %378 = vmatprep.subr.bf16.mxu0 0
      %379 = vmatpush1.bf16.msra.mxu0 0
      %380 = vmatprep.subr.bf16.mxu0 0
      %381 = vmatpush1.bf16.msra.mxu0 0
      %382 = vmatprep.subr.bf16.mxu0 0
      %383 = vmatpush1.bf16.msra.mxu0 0
      %384 = vmatprep.subr.bf16.mxu0 0
      %385 = vmatpush1.bf16.msra.mxu0 0
      %386 = vmatprep.subr.bf16.mxu0 0
      %387 = vmatpush1.bf16.msra.mxu0 0
      %388 = vmatprep.subr.bf16.mxu0 0
      %389 = vmatpush1.bf16.msra.mxu0 0
      %390 = vmatprep.mubr.bf16.mxu0 0
      %391 = vmatmul.mubr.bf16.gmra.mrb[0].mxu0 %v328
      %v392 = vpop.f32.mrb[0].mxu0
      %v393 = vadd.f32 %v314, %v392
      %v394 = vpop.f32.mrb[0].mxu0
      %v395 = vadd.f32 %v318, %v394
      %v396 = vpop.f32.mrb[0].mxu0
      %v397 = vadd.f32 %v314, %v396
      %v398 = vpop.f32.mrb[0].mxu0
      %v399 = vadd.f32 %v318, %v398
      %400 = vmatprep.mubr.bf16.mxu0 0
      %401 = vmatmul.mubr.bf16.gmra.mrb[0].mxu0 %v331
      %v402 = vpop.f32.mrb[0].mxu0
      %v403 = vadd.f32 %v314, %v402
      %v404 = vpop.f32.mrb[0].mxu0
      %v405 = vadd.f32 %v318, %v404
      %v406 = vpop.f32.mrb[0].mxu0
      %v407 = vadd.f32 %v314, %v406
      %v408 = vpop.f32.mrb[0].mxu0
      %v409 = vadd.f32 %v318, %v408
      %410 = vmatprep.mubr.bf16.mxu0 0
      %411 = vmatmul.mubr.bf16.gmra.mrb[0].mxu0 %v334
      %v412 = vpop.f32.mrb[0].mxu0
      %v413 = vadd.f32 %v314, %v412
      %v414 = vpop.f32.mrb[0].mxu0
      %v415 = vadd.f32 %v318, %v414
      %v416 = vpop.f32.mrb[0].mxu0
      %v417 = vadd.f32 %v314, %v416
      %v418 = vpop.f32.mrb[0].mxu0
      %v419 = vadd.f32 %v318, %v418
      %420 = vmatprep.mubr.bf16.mxu0 0
      %421 = vmatmul.mubr.bf16.gmra.mrb[0].mxu0 %v337
      %v422 = vpop.f32.mrb[0].mxu0
      %v423 = vadd.f32 %v314, %v422
      %v424 = vpop.f32.mrb[0].mxu0
      %v425 = vadd.f32 %v318, %v424
      %v426 = vpop.f32.mrb[0].mxu0
      %v427 = vadd.f32 %v314, %v426
      %v428 = vpop.f32.mrb[0].mxu0
      %v429 = vadd.f32 %v318, %v428
      %430 = vmatprep.mubr.bf16.mxu0 0
      %431 = vmatmul.mubr.bf16.gmra.mrb[0].mxu0 %v340
      %v432 = vpop.f32.mrb[0].mxu0
      %v433 = vadd.f32 %v314, %v432
      %v434 = vpop.f32.mrb[0].mxu0
      %v435 = vadd.f32 %v318, %v434
      %v436 = vpop.f32.mrb[0].mxu0
      %v437 = vadd.f32 %v314, %v436
      %v438 = vpop.f32.mrb[0].mxu0
      %v439 = vadd.f32 %v318, %v438
      %440 = vmatprep.mubr.bf16.mxu0 0
      %441 = vmatmul.mubr.bf16.gmra.mrb[0].mxu0 %v343
      %v442 = vpop.f32.mrb[0].mxu0
      %v443 = vadd.f32 %v314, %v442
      %v444 = vpop.f32.mrb[0].mxu0
      %v445 = vadd.f32 %v318, %v444
      %v446 = vpop.f32.mrb[0].mxu0
      %v447 = vadd.f32 %v314, %v446
      %v448 = vpop.f32.mrb[0].mxu0
      %v449 = vadd.f32 %v318, %v448
      %450 = vmatprep.mubr.bf16.mxu0 0
      %451 = vmatmul.mubr.bf16.gmra.mrb[0].mxu0 %v346
      %v452 = vpop.f32.mrb[0].mxu0
      %v453 = vadd.f32 %v314, %v452
      %v454 = vpop.f32.mrb[0].mxu0
      %v455 = vadd.f32 %v318, %v454
      %v456 = vpop.f32.mrb[0].mxu0
      %v457 = vadd.f32 %v314, %v456
      %v458 = vpop.f32.mrb[0].mxu0
      %v459 = vadd.f32 %v318, %v458
      %460 = vmatprep.mubr.bf16.mxu0 0
      %461 = vmatmul.mubr.bf16.gmra.mrb[0].mxu0 %v349
      %v462 = vpop.f32.mrb[0].mxu0
      %v463 = vadd.f32 %v314, %v462
      %v464 = vpop.f32.mrb[0].mxu0
      %v465 = vadd.f32 %v318, %v464
      %v466 = vpop.f32.mrb[0].mxu0
      %v467 = vadd.f32 %v314, %v466
      %v468 = vpop.f32.mrb[0].mxu0
      %v469 = vadd.f32 %v318, %v468
      %470 = vdwg.mxu0
      %v471 = vmax.f32 %v393, 0.0
      %v472 = vmax.f32 %v395, 0.0
      %v473 = vmax.f32 %v397, 0.0
      %v474 = vmax.f32 %v399, 0.0
      %v475 = vmax.f32 %v403, 0.0
      %v476 = vmax.f32 %v405, 0.0
      %v477 = vmax.f32 %v407, 0.0
      %v478 = vmax.f32 %v409, 0.0
      %v479 = vmax.f32 %v413, 0.0
      %v480 = vmax.f32 %v415, 0.0
      %v481 = vmax.f32 %v417, 0.0
      %v482 = vmax.f32 %v419, 0.0
      %v483 = vmax.f32 %v423, 0.0
      %v484 = vmax.f32 %v425, 0.0
      %v485 = vmax.f32 %v427, 0.0
      %v486 = vmax.f32 %v429, 0.0
      %v487 = vmax.f32 %v433, 0.0
      %v488 = vmax.f32 %v435, 0.0
      %v489 = vmax.f32 %v437, 0.0
      %v490 = vmax.f32 %v439, 0.0
      %v491 = vmax.f32 %v443, 0.0
      %v492 = vmax.f32 %v445, 0.0
      %v493 = vmax.f32 %v447, 0.0
      %v494 = vmax.f32 %v449, 0.0
      %v495 = vmax.f32 %v453, 0.0
      %v496 = vmax.f32 %v455, 0.0
      %v497 = vmax.f32 %v457, 0.0
      %v498 = vmax.f32 %v459, 0.0
      %v499 = vmax.f32 %v463, 0.0
      %v500 = vmax.f32 %v465, 0.0
      %v501 = vmax.f32 %v467, 0.0
      %v502 = vmax.f32 %v469, 0.0
      %v503 = vpack.c.bf16 %v473, %v471
      %v504 = vpack.c.bf16 %v474, %v472
      %v505 = vpack.c.bf16 %v477, %v475
      %v506 = vpack.c.bf16 %v478, %v476
      %v507 = vpack.c.bf16 %v481, %v479
      %v508 = vpack.c.bf16 %v482, %v480
      %v509 = vpack.c.bf16 %v485, %v483
      %v510 = vpack.c.bf16 %v486, %v484
      %v511 = vpack.c.bf16 %v489, %v487
      %v512 = vpack.c.bf16 %v490, %v488
      %v513 = vpack.c.bf16 %v493, %v491
      %v514 = vpack.c.bf16 %v494, %v492
      %v515 = vpack.c.bf16 %v497, %v495
      %v516 = vpack.c.bf16 %v498, %v496
      %v517 = vpack.c.bf16 %v501, %v499
      %v518 = vpack.c.bf16 %v502, %v500
      %v519 = vld [vmem:[%s3] sm:$0xff]
      %v520 = vld [vmem:[%s3 + $0x8] sm:$0xff]
      %v521 = vld [vmem:[%s3 + $0x10] sm:$0xff]
      %v522 = vld [vmem:[%s3 + $0x18] sm:$0xff]
      %v523 = vld [vmem:[%s3 + $0x20] sm:$0xff]
      %v524 = vld [vmem:[%s3 + $0x28] sm:$0xff]
      %v525 = vld [vmem:[%s3 + $0x30] sm:$0xff]
      %v526 = vld [vmem:[%s3 + $0x38] sm:$0xff]
      %v527 = vld [vmem:[%s3 + $0x40] sm:$0xff]
      %v528 = vld [vmem:[%s3 + $0x48] sm:$0xff]
      %v529 = vld [vmem:[%s3 + $0x50] sm:$0xff]
      %v530 = vld [vmem:[%s3 + $0x58] sm:$0xff]
      %v531 = vld [vmem:[%s3 + $0x60] sm:$0xff]
      %v532 = vld [vmem:[%s3 + $0x68] sm:$0xff]
      %v533 = vld [vmem:[%s3 + $0x70] sm:$0xff]
      %v534 = vld [vmem:[%s3 + $0x78] sm:$0xff]
      %v535 = vld [vmem:[%s3 + $0x80] sm:$0xff]
      %v536 = vld [vmem:[%s3 + $0x88] sm:$0xff]
      %v537 = vld [vmem:[%s3 + $0x90] sm:$0xff]
      %v538 = vld [vmem:[%s3 + $0x98] sm:$0xff]
      %v539 = vld [vmem:[%s3 + $0xa0] sm:$0xff]
      %v540 = vld [vmem:[%s3 + $0xa8] sm:$0xff]
      %v541 = vld [vmem:[%s3 + $0xb0] sm:$0xff]
      %v542 = vld [vmem:[%s3 + $0xb8] sm:$0xff]
      %v543 = vld [vmem:[%s3 + $0xc0] sm:$0xff]
      %v544 = vld [vmem:[%s3 + $0xc8] sm:$0xff]
      %v545 = vld [vmem:[%s3 + $0xd0] sm:$0xff]
      %v546 = vld [vmem:[%s3 + $0xd8] sm:$0xff]
      %v547 = vld [vmem:[%s3 + $0xe0] sm:$0xff]
      %v548 = vld [vmem:[%s3 + $0xe8] sm:$0xff]
      %v549 = vld [vmem:[%s3 + $0xf0] sm:$0xff]
      %v550 = vld [vmem:[%s3 + $0xf8] sm:$0xff]
      %v551 = vld [vmem:[%s4] sm:$0x3]
      %v553 = vlaneseq
      %v554 = vshrl.u32 %v553, 7
      %v555 = vsub.s32 0, %v554
      %v556 = vrot.slane %v551, %v555
      %v557 = vlaneseq
      %v558 = vshrl.u32 %v557, 7
      %v559 = vsub.s32 1, %v558
      %v560 = vrot.slane %v551, %v559
      %v595 = vunpack.c.l.b16 %v519
      %v596 = vunpack.c.h.b16 %v519
      %v597 = vunpack.c.l.b16 %v520
      %v598 = vunpack.c.h.b16 %v520
      %v599 = vunpack.c.l.b16 %v521
      %v600 = vunpack.c.h.b16 %v521
      %v601 = vunpack.c.l.b16 %v522
      %v602 = vunpack.c.h.b16 %v522
      %v603 = vunpack.c.l.b16 %v523
      %v604 = vunpack.c.h.b16 %v523
      %v605 = vunpack.c.l.b16 %v524
      %v606 = vunpack.c.h.b16 %v524
      %v607 = vunpack.c.l.b16 %v525
      %v608 = vunpack.c.h.b16 %v525
      %v609 = vunpack.c.l.b16 %v526
      %v610 = vunpack.c.h.b16 %v526
      %v611 = vunpack.c.l.b16 %v527
      %v612 = vunpack.c.h.b16 %v527
      %v613 = vunpack.c.l.b16 %v528
      %v614 = vunpack.c.h.b16 %v528
      %v615 = vunpack.c.l.b16 %v529
      %v616 = vunpack.c.h.b16 %v529
      %v617 = vunpack.c.l.b16 %v530
      %v618 = vunpack.c.h.b16 %v530
      %v619 = vunpack.c.l.b16 %v531
      %v620 = vunpack.c.h.b16 %v531
      %v621 = vunpack.c.l.b16 %v532
      %v622 = vunpack.c.h.b16 %v532
      %v623 = vunpack.c.l.b16 %v533
      %v624 = vunpack.c.h.b16 %v533
      %v625 = vunpack.c.l.b16 %v534
      %v626 = vunpack.c.h.b16 %v534
      %v627 = vunpack.c.l.b16 %v535
      %v628 = vunpack.c.h.b16 %v535
      %v629 = vunpack.c.l.b16 %v536
      %v630 = vunpack.c.h.b16 %v536
      %v631 = vunpack.c.l.b16 %v537
      %v632 = vunpack.c.h.b16 %v537
      %v633 = vunpack.c.l.b16 %v538
      %v634 = vunpack.c.h.b16 %v538
      %v635 = vunpack.c.l.b16 %v539
      %v636 = vunpack.c.h.b16 %v539
      %v637 = vunpack.c.l.b16 %v540
      %v638 = vunpack.c.h.b16 %v540
      %v639 = vunpack.c.l.b16 %v541
      %v640 = vunpack.c.h.b16 %v541
      %v641 = vunpack.c.l.b16 %v542
      %v642 = vunpack.c.h.b16 %v542
      %v643 = vunpack.c.l.b16 %v543
      %v644 = vunpack.c.h.b16 %v543
      %v645 = vunpack.c.l.b16 %v544
      %v646 = vunpack.c.h.b16 %v544
      %v647 = vunpack.c.l.b16 %v545
      %v648 = vunpack.c.h.b16 %v545
      %v649 = vunpack.c.l.b16 %v546
      %v650 = vunpack.c.h.b16 %v546
      %v651 = vunpack.c.l.b16 %v547
      %v652 = vunpack.c.h.b16 %v547
      %v653 = vunpack.c.l.b16 %v548
      %v654 = vunpack.c.h.b16 %v548
      %v655 = vunpack.c.l.b16 %v549
      %v656 = vunpack.c.h.b16 %v549
      %v657 = vunpack.c.l.b16 %v550
      %v658 = vunpack.c.h.b16 %v550
      %v659 = vpack.c.b16 %v597, %v595
      %v660 = vpack.c.b16 %v598, %v596
      %v661 = vpack.c.b16 %v601, %v599
      %v662 = vpack.c.b16 %v602, %v600
      %v663 = vpack.c.b16 %v605, %v603
      %v664 = vpack.c.b16 %v606, %v604
      %v665 = vpack.c.b16 %v609, %v607
      %v666 = vpack.c.b16 %v610, %v608
      %v667 = vpack.c.b16 %v613, %v611
      %v668 = vpack.c.b16 %v614, %v612
      %v669 = vpack.c.b16 %v617, %v615
      %v670 = vpack.c.b16 %v618, %v616
      %v671 = vpack.c.b16 %v621, %v619
      %v672 = vpack.c.b16 %v622, %v620
      %v673 = vpack.c.b16 %v625, %v623
      %v674 = vpack.c.b16 %v626, %v624
      %v675 = vpack.c.b16 %v629, %v627
      %v676 = vpack.c.b16 %v630, %v628
      %v677 = vpack.c.b16 %v633, %v631
      %v678 = vpack.c.b16 %v634, %v632
      %v679 = vpack.c.b16 %v637, %v635
      %v680 = vpack.c.b16 %v638, %v636
      %v681 = vpack.c.b16 %v641, %v639
      %v682 = vpack.c.b16 %v642, %v640
      %v683 = vpack.c.b16 %v645, %v643
      %v684 = vpack.c.b16 %v646, %v644
      %v685 = vpack.c.b16 %v649, %v647
      %v686 = vpack.c.b16 %v650, %v648
      %v687 = vpack.c.b16 %v653, %v651
      %v688 = vpack.c.b16 %v654, %v652
      %v689 = vpack.c.b16 %v657, %v655
      %v690 = vpack.c.b16 %v658, %v656
      %723 = vmatprep.subr.bf16.mxu0 %v660
      %724 = vmatpush1.bf16.msra.mxu0 %v659
      %725 = vmatprep.subr.bf16.mxu0 %v662
      %726 = vmatpush1.bf16.msra.mxu0 %v661
      %727 = vmatprep.subr.bf16.mxu0 %v664
      %728 = vmatpush1.bf16.msra.mxu0 %v663
      %729 = vmatprep.subr.bf16.mxu0 %v666
      %730 = vmatpush1.bf16.msra.mxu0 %v665
      %731 = vmatprep.subr.bf16.mxu0 %v668
      %732 = vmatpush1.bf16.msra.mxu0 %v667
      %733 = vmatprep.subr.bf16.mxu0 %v670
      %734 = vmatpush1.bf16.msra.mxu0 %v669
      %735 = vmatprep.subr.bf16.mxu0 %v672
      %736 = vmatpush1.bf16.msra.mxu0 %v671
      %737 = vmatprep.subr.bf16.mxu0 %v674
      %738 = vmatpush1.bf16.msra.mxu0 %v673
      %739 = vmatprep.subr.bf16.mxu0 %v676
      %740 = vmatpush1.bf16.msra.mxu0 %v675
      %741 = vmatprep.subr.bf16.mxu0 %v678
      %742 = vmatpush1.bf16.msra.mxu0 %v677
      %743 = vmatprep.subr.bf16.mxu0 %v680
      %744 = vmatpush1.bf16.msra.mxu0 %v679
      %745 = vmatprep.subr.bf16.mxu0 %v682
      %746 = vmatpush1.bf16.msra.mxu0 %v681
      %747 = vmatprep.subr.bf16.mxu0 %v684
      %748 = vmatpush1.bf16.msra.mxu0 %v683
      %749 = vmatprep.subr.bf16.mxu0 %v686
      %750 = vmatpush1.bf16.msra.mxu0 %v685
      %751 = vmatprep.subr.bf16.mxu0 %v688
      %752 = vmatpush1.bf16.msra.mxu0 %v687
      %753 = vmatprep.subr.bf16.mxu0 %v690
      %754 = vmatpush1.bf16.msra.mxu0 %v689
      %755 = vmatprep.mubr.bf16.mxu0 %v504
      %756 = vmatmul.mubr.bf16.gmra.mrb[0].mxu0 %v503
      %v757 = vpop.f32.mrb[0].mxu0
      %v758 = vadd.f32 %v556, %v757
      %v759 = vpop.f32.mrb[0].mxu0
      %v760 = vadd.f32 %v560, %v759
      %v761 = vpop.f32.mrb[0].mxu0
      %v762 = vadd.f32 %v556, %v761
      %v763 = vpop.f32.mrb[0].mxu0
      %v764 = vadd.f32 %v560, %v763
      %765 = vmatprep.mubr.bf16.mxu0 %v506
      %766 = vmatmul.mubr.bf16.gmra.mrb[0].mxu0 %v505
      %v767 = vpop.f32.mrb[0].mxu0
      %v768 = vadd.f32 %v556, %v767
      %v769 = vpop.f32.mrb[0].mxu0
      %v770 = vadd.f32 %v560, %v769
      %v771 = vpop.f32.mrb[0].mxu0
      %v772 = vadd.f32 %v556, %v771
      %v773 = vpop.f32.mrb[0].mxu0
      %v774 = vadd.f32 %v560, %v773
      %775 = vmatprep.mubr.bf16.mxu0 %v508
      %776 = vmatmul.mubr.bf16.gmra.mrb[0].mxu0 %v507
      %v777 = vpop.f32.mrb[0].mxu0
      %v778 = vadd.f32 %v556, %v777
      %v779 = vpop.f32.mrb[0].mxu0
      %v780 = vadd.f32 %v560, %v779
      %v781 = vpop.f32.mrb[0].mxu0
      %v782 = vadd.f32 %v556, %v781
      %v783 = vpop.f32.mrb[0].mxu0
      %v784 = vadd.f32 %v560, %v783
      %785 = vmatprep.mubr.bf16.mxu0 %v510
      %786 = vmatmul.mubr.bf16.gmra.mrb[0].mxu0 %v509
      %v787 = vpop.f32.mrb[0].mxu0
      %v788 = vadd.f32 %v556, %v787
      %v789 = vpop.f32.mrb[0].mxu0
      %v790 = vadd.f32 %v560, %v789
      %v791 = vpop.f32.mrb[0].mxu0
      %v792 = vadd.f32 %v556, %v791
      %v793 = vpop.f32.mrb[0].mxu0
      %v794 = vadd.f32 %v560, %v793
      %795 = vmatprep.mubr.bf16.mxu0 %v512
      %796 = vmatmul.mubr.bf16.gmra.mrb[0].mxu0 %v511
      %v797 = vpop.f32.mrb[0].mxu0
      %v798 = vadd.f32 %v556, %v797
      %v799 = vpop.f32.mrb[0].mxu0
      %v800 = vadd.f32 %v560, %v799
      %v801 = vpop.f32.mrb[0].mxu0
      %v802 = vadd.f32 %v556, %v801
      %v803 = vpop.f32.mrb[0].mxu0
      %v804 = vadd.f32 %v560, %v803
      %805 = vmatprep.mubr.bf16.mxu0 %v514
      %806 = vmatmul.mubr.bf16.gmra.mrb[0].mxu0 %v513
      %v807 = vpop.f32.mrb[0].mxu0
      %v808 = vadd.f32 %v556, %v807
      %v809 = vpop.f32.mrb[0].mxu0
      %v810 = vadd.f32 %v560, %v809
      %v811 = vpop.f32.mrb[0].mxu0
      %v812 = vadd.f32 %v556, %v811
      %v813 = vpop.f32.mrb[0].mxu0
      %v814 = vadd.f32 %v560, %v813
      %815 = vmatprep.mubr.bf16.mxu0 %v516
      %816 = vmatmul.mubr.bf16.gmra.mrb[0].mxu0 %v515
      %v817 = vpop.f32.mrb[0].mxu0
      %v818 = vadd.f32 %v556, %v817
      %v819 = vpop.f32.mrb[0].mxu0
      %v820 = vadd.f32 %v560, %v819
      %v821 = vpop.f32.mrb[0].mxu0
      %v822 = vadd.f32 %v556, %v821
      %v823 = vpop.f32.mrb[0].mxu0
      %v824 = vadd.f32 %v560, %v823
      %825 = vmatprep.mubr.bf16.mxu0 %v518
      %826 = vmatmul.mubr.bf16.gmra.mrb[0].mxu0 %v517
      %v827 = vpop.f32.mrb[0].mxu0
      %v828 = vadd.f32 %v556, %v827
      %v829 = vpop.f32.mrb[0].mxu0
      %v830 = vadd.f32 %v560, %v829
      %v831 = vpop.f32.mrb[0].mxu0
      %v832 = vadd.f32 %v556, %v831
      %v833 = vpop.f32.mrb[0].mxu0
      %v834 = vadd.f32 %v560, %v833
      %835 = vdwg.mxu0
      %v836 = vmax.f32 %v758, 0.0
      %v837 = vmax.f32 %v760, 0.0
      %v838 = vmax.f32 %v762, 0.0
      %v839 = vmax.f32 %v764, 0.0
      %v840 = vmax.f32 %v768, 0.0
      %v841 = vmax.f32 %v770, 0.0
      %v842 = vmax.f32 %v772, 0.0
      %v843 = vmax.f32 %v774, 0.0
      %v844 = vmax.f32 %v778, 0.0
      %v845 = vmax.f32 %v780, 0.0
      %v846 = vmax.f32 %v782, 0.0
      %v847 = vmax.f32 %v784, 0.0
      %v848 = vmax.f32 %v788, 0.0
      %v849 = vmax.f32 %v790, 0.0
      %v850 = vmax.f32 %v792, 0.0
      %v851 = vmax.f32 %v794, 0.0
      %v852 = vmax.f32 %v798, 0.0
      %v853 = vmax.f32 %v800, 0.0
      %v854 = vmax.f32 %v802, 0.0
      %v855 = vmax.f32 %v804, 0.0
      %v856 = vmax.f32 %v808, 0.0
      %v857 = vmax.f32 %v810, 0.0
      %v858 = vmax.f32 %v812, 0.0
      %v859 = vmax.f32 %v814, 0.0
      %v860 = vmax.f32 %v818, 0.0
      %v861 = vmax.f32 %v820, 0.0
      %v862 = vmax.f32 %v822, 0.0
      %v863 = vmax.f32 %v824, 0.0
      %v864 = vmax.f32 %v828, 0.0
      %v865 = vmax.f32 %v830, 0.0
      %v866 = vmax.f32 %v832, 0.0
      %v867 = vmax.f32 %v834, 0.0
      %v868 = vld [vmem:[%s5] sm:$0x3]
      %v870 = vlaneseq
      %v871 = vshrl.u32 %v870, 7
      %v872 = vsub.s32 0, %v871
      %v873 = vrot.slane %v868, %v872
      %v874 = vlaneseq
      %v875 = vshrl.u32 %v874, 7
      %v876 = vsub.s32 1, %v875
      %v877 = vrot.slane %v868, %v876
      %v880 = vmul.f32 %v836, %v873
      %v881 = vmul.f32 %v837, %v877
      %v882 = vmul.f32 %v838, %v873
      %v883 = vmul.f32 %v839, %v877
      %v884 = vmul.f32 %v840, %v873
      %v885 = vmul.f32 %v841, %v877
      %v886 = vmul.f32 %v842, %v873
      %v887 = vmul.f32 %v843, %v877
      %v888 = vmul.f32 %v844, %v873
      %v889 = vmul.f32 %v845, %v877
      %v890 = vmul.f32 %v846, %v873
      %v891 = vmul.f32 %v847, %v877
      %v892 = vmul.f32 %v848, %v873
      %v893 = vmul.f32 %v849, %v877
      %v894 = vmul.f32 %v850, %v873
      %v895 = vmul.f32 %v851, %v877
      %v896 = vmul.f32 %v852, %v873
      %v897 = vmul.f32 %v853, %v877
      %v898 = vmul.f32 %v854, %v873
      %v899 = vmul.f32 %v855, %v877
      %v900 = vmul.f32 %v856, %v873
      %v901 = vmul.f32 %v857, %v877
      %v902 = vmul.f32 %v858, %v873
      %v903 = vmul.f32 %v859, %v877
      %v904 = vmul.f32 %v860, %v873
      %v905 = vmul.f32 %v861, %v877
      %v906 = vmul.f32 %v862, %v873
      %v907 = vmul.f32 %v863, %v877
      %v908 = vmul.f32 %v864, %v873
      %v909 = vmul.f32 %v865, %v877
      %v910 = vmul.f32 %v866, %v873
      %v911 = vmul.f32 %v867, %v877
      %v912 = vadd.f32 %v880, %v881
      %913 = vadd.xlane.f32.xlu0 %v912
      %v914 = vpop.xlane.xlu0 %913
      %v915 = vadd.f32 %v882, %v883
      %916 = vadd.xlane.f32.xlu0 %v915
      %v917 = vpop.xlane.xlu0 %916
      %v918 = vadd.f32 %v884, %v885
      %919 = vadd.xlane.f32.xlu0 %v918
      %v920 = vpop.xlane.xlu0 %919
      %v921 = vadd.f32 %v886, %v887
      %922 = vadd.xlane.f32.xlu0 %v921
      %v923 = vpop.xlane.xlu0 %922
      %v924 = vadd.f32 %v888, %v889
      %925 = vadd.xlane.f32.xlu0 %v924
      %v926 = vpop.xlane.xlu0 %925
      %v927 = vadd.f32 %v890, %v891
      %928 = vadd.xlane.f32.xlu0 %v927
      %v929 = vpop.xlane.xlu0 %928
      %v930 = vadd.f32 %v892, %v893
      %931 = vadd.xlane.f32.xlu0 %v930
      %v932 = vpop.xlane.xlu0 %931
      %v933 = vadd.f32 %v894, %v895
      %934 = vadd.xlane.f32.xlu0 %v933
      %v935 = vpop.xlane.xlu0 %934
      %v936 = vadd.f32 %v896, %v897
      %937 = vadd.xlane.f32.xlu0 %v936
      %v938 = vpop.xlane.xlu0 %937
      %v939 = vadd.f32 %v898, %v899
      %940 = vadd.xlane.f32.xlu0 %v939
      %v941 = vpop.xlane.xlu0 %940
      %v942 = vadd.f32 %v900, %v901
      %943 = vadd.xlane.f32.xlu0 %v942
      %v944 = vpop.xlane.xlu0 %943
      %v945 = vadd.f32 %v902, %v903
      %946 = vadd.xlane.f32.xlu0 %v945
      %v947 = vpop.xlane.xlu0 %946
      %v948 = vadd.f32 %v904, %v905
      %949 = vadd.xlane.f32.xlu0 %v948
      %v950 = vpop.xlane.xlu0 %949
      %v951 = vadd.f32 %v906, %v907
      %952 = vadd.xlane.f32.xlu0 %v951
      %v953 = vpop.xlane.xlu0 %952
      %v954 = vadd.f32 %v908, %v909
      %955 = vadd.xlane.f32.xlu0 %v954
      %v956 = vpop.xlane.xlu0 %955
      %v957 = vadd.f32 %v910, %v911
      %958 = vadd.xlane.f32.xlu0 %v957
      %v959 = vpop.xlane.xlu0 %958
      %s960 = sld [smem:[#allocation2]]
      %v961 = vstv %s960
      %v962 = vadd.f32 %v914, %v961
      %v963 = vadd.f32 %v917, %v961
      %v964 = vadd.f32 %v920, %v961
      %v965 = vadd.f32 %v923, %v961
      %v966 = vadd.f32 %v926, %v961
      %v967 = vadd.f32 %v929, %v961
      %v968 = vadd.f32 %v932, %v961
      %v969 = vadd.f32 %v935, %v961
      %v970 = vadd.f32 %v938, %v961
      %v971 = vadd.f32 %v941, %v961
      %v972 = vadd.f32 %v944, %v961
      %v973 = vadd.f32 %v947, %v961
      %v974 = vadd.f32 %v950, %v961
      %v975 = vadd.f32 %v953, %v961
      %v976 = vadd.f32 %v956, %v961
      %v977 = vadd.f32 %v959, %v961
      %vm978 = vcmask 7168
      %979 = vst.msk [vmem:[%s281] sm:$0xff] %vm978, %v962
      %980 = vst.msk [vmem:[%s281 + $0x8] sm:$0xff] %vm978, %v963
      %981 = vst.msk [vmem:[%s281 + $0x10] sm:$0xff] %vm978, %v964
      %982 = vst.msk [vmem:[%s281 + $0x18] sm:$0xff] %vm978, %v965
      %983 = vst.msk [vmem:[%s281 + $0x20] sm:$0xff] %vm978, %v966
      %984 = vst.msk [vmem:[%s281 + $0x28] sm:$0xff] %vm978, %v967
      %985 = vst.msk [vmem:[%s281 + $0x30] sm:$0xff] %vm978, %v968
      %986 = vst.msk [vmem:[%s281 + $0x38] sm:$0xff] %vm978, %v969
      %987 = vst.msk [vmem:[%s281 + $0x40] sm:$0xff] %vm978, %v970
      %988 = vst.msk [vmem:[%s281 + $0x48] sm:$0xff] %vm978, %v971
      %989 = vst.msk [vmem:[%s281 + $0x50] sm:$0xff] %vm978, %v972
      %990 = vst.msk [vmem:[%s281 + $0x58] sm:$0xff] %vm978, %v973
      %991 = vst.msk [vmem:[%s281 + $0x60] sm:$0xff] %vm978, %v974
      %992 = vst.msk [vmem:[%s281 + $0x68] sm:$0xff] %vm978, %v975
      %993 = vst.msk [vmem:[%s281 + $0x70] sm:$0xff] %vm978, %v976
      %994 = vst.msk [vmem:[%s281 + $0x78] sm:$0xff] %vm978, %v977
      %s995 = smul.u32 16, %s19
      %p996 = scmp.lt.s32.totalorder %s995, 31
      %s997 = scalar_select %p996, %s995, 31
      %s998 = smul.addr %s997, 8
      %s999 = scalar_lea.vmem %s7, %s998
      // Predicated region
      $region49: #{value_network_forward.1} parent=47 // pred_check
        %p1000 = pneg %p189
      $region50: #{value_network_forward.1} parent=47 // pred_check_branch
        %1002 = sbr.rel (%p1000) target = $region52
      $region51: #{value_network_forward.1} parent=47 // pred_region
        %s1003 = smul.u32 16, %s19
      $region52: #{value_network_forward.1} parent=47 // pred_fallthru
        _
    $region48: #{value_network_forward.1} parent=5 // pred_fallthru
      _
    %p1004 = scmp.le.s32.totalorder 2, %s14
    // Predicated region
    $region53: #{value_network_forward.1} parent=5 // pred_check
      %p1005 = pneg %p1004
    $region54: #{value_network_forward.1} parent=5 // pred_check_branch
      %1007 = sbr.rel (%p1005) target = $region56
    $region55: #{value_network_forward.1} parent=5 // pred_region
      %s1008 = ssub.s32 %s14, 2
      // Predicated region
      $region57: #{value_network_forward.1} parent=55 // pred_check
        %p1009 = pneg %p195
      $region58: #{value_network_forward.1} parent=55 // pred_check_branch
        %1011 = sbr.rel (%p1009) target = $region60
      $region59: #{value_network_forward.1} parent=55 // pred_region
        %s1012 = smul.u32 16, %s20
        %p1013 = scmp.lt.s32.totalorder %s1012, 31
        %s1014 = scalar_select %p1013, %s1012, 31
        %s1015 = smul.addr %s1014, 8
        %s1016 = scalar_lea.vmem %s7, %s1015
      $region60: #{value_network_forward.1} parent=55 // pred_fallthru
        _
    $region56: #{value_network_forward.1} parent=5 // pred_fallthru
      _
  $region6: #{value_network_forward.1} parent=0 // loop_footer
    %s18 = sadd.s32 1, %s14
  $region7: #{value_network_forward.1} parent=0 // loop_footer_branch
    %13 = sbr.rel target = $region3
  $region8: #{value_network_forward.1} parent=0 // loop_exit
    _

</llo_original>
